<compile_context>
chip_gen: v6e
topology: v6e:2x2x1
jax: 0.10.0
libtpu: 0.0.40
codegen_flags: <defaults>
</compile_context>

<pallas_src>
import numpy as np
import jax
import jax.numpy as jnp
from jax.experimental import pallas as pl
from jax.experimental.pallas import tpu as pltpu


def _round_up(x: int, m: int) -> int:
    return ((x + m - 1) // m) * m


def _round_down(x: int, m: int) -> int:
    return (x // m) * m


def _vmem_cap_bytes() -> int:
    """Per-generation safe VMEM request: ~3/4 of physical capacity.

    v5e/v6e: 128 MiB physical -> ~96 MiB; v7x: 64 MiB physical -> ~48 MiB
    (headroom for Mosaic internal scratch / semaphores).
    """
    phys = None
    try:
        phys = int(pltpu.get_tpu_info().vmem_capacity_bytes)
    except Exception:
        phys = None
    if phys is None:
        try:
            kind = jax.devices()[0].device_kind.lower()
            phys = 64 * 2**20 if "v7" in kind else 128 * 2**20
        except Exception:
            phys = 64 * 2**20  # conservative default
    return (phys * 3) // 4


def _maybe_pad(x, rows, cols):
    """Zero-pad a 2-D array only when needed (avoid materializing copies)."""
    r, c = x.shape
    if r == rows and c == cols:
        return x
    return jnp.pad(x, ((0, rows - r), (0, cols - c)))


def _selection_matrices(dim, dim_p, dim_h, dim_h_p, dtype):
    """Static 0/1 selection matrices, zero-padded to lane-dense shapes.

      S^T: (dim_p, dim_h_p),  S^T[j, k] = [col(k) == j]
      R:   (dim_h_p, dim_p),  R[k, i]   = [row(k) == i]

    np.tril_indices(k=-1) enumerates strictly-lower entries row-major,
    matching the PyTorch double loop (i outer, j inner, j < i).
    """
    rows, cols = np.tril_indices(dim, k=-1)
    assert rows.size == dim_h
    s_t = np.zeros((dim_p, dim_h_p), dtype=np.float32)
    r = np.zeros((dim_h_p, dim_p), dtype=np.float32)
    ks = np.arange(dim_h)
    s_t[cols, ks] = 1.0
    r[ks, rows] = 1.0
    # 0/1 values are exact in bf16 as well, so the cast below is lossless.
    return jnp.asarray(s_t, dtype=dtype), jnp.asarray(r, dtype=dtype)


# ---------------------------------------------------------------------------
# Kernels
# ---------------------------------------------------------------------------

def _linear_map_kernel_resident(z_ref, h_ref, st_ref, r_ref, o_ref):
    """Resident path: grid = (batch tiles,). S^T / R are f32 and VMEM-resident
    for the whole call (index_map (0,0)), so there are no per-step upcasts and
    no re-streaming per batch tile.

    z_ref  : (TB, Dp)     f32
    h_ref  : (TB, DHp)    f32
    st_ref : (Dp, DHp)    f32 (0/1)
    r_ref  : (DHp, Dp)    f32 (0/1)
    o_ref  : (TB, Dp)     f32
    """
    z = z_ref[...]
    # Gather z columns for every packed index k (MXU).
    zc = jnp.dot(z, st_ref[...], preferred_element_type=jnp.float32)
    u = h_ref[...] * zc                                        # VPU
    # Scatter-add h[b,k]*z[b,col(k)] into its row (MXU) and add identity part.
    o_ref[...] = (z + jnp.dot(u, r_ref[...],
                              preferred_element_type=jnp.float32)).astype(o_ref.dtype)


def _linear_map_kernel_streamed(z_ref, h_ref, st_ref, r_ref, o_ref):
    """Streamed path: grid = (batch tiles, dim_h chunks), reduction axis last.
    The output block is resident across k (index map (b, 0)), so it doubles as
    the accumulator: init to z at k == 0, accumulate the scatter dot per step.

    z_ref  : (TB, Dp)  f32 (resident across k)
    h_ref  : (TB, TK)  f32
    st_ref : (Dp, TK)  bf16 (0/1)
    r_ref  : (TK, Dp)  bf16 (0/1)
    o_ref  : (TB, Dp)  f32 (resident across k)
    """
    k = pl.program_id(1)

    @pl.when(k == 0)
    def _init():
        o_ref[...] = z_ref[...]

    z = z_ref[...]
    st = st_ref[...].astype(jnp.float32)   # exact upcast of 0/1
    r = r_ref[...].astype(jnp.float32)

    zc = jnp.dot(z, st, preferred_element_type=jnp.float32)   # (TB, TK)
    u = h_ref[...] * zc                                        # (TB, TK)
    o_ref[...] += jnp.dot(u, r, preferred_element_type=jnp.float32)


# ---------------------------------------------------------------------------
# Wrapper
# ---------------------------------------------------------------------------

def linear_map_forward(z, h, *, max_tb=512, max_tk=512, force_streamed=False):
    """Pallas implementation of LinearMap.forward.

    Args:
      z: (batch, dim) float32
      h: (batch, dim*(dim-1)//2) float32
    Returns:
      f_z: (batch, dim) float32
      logdet: (1,) float32 zeros
    """
    z = jnp.asarray(z, dtype=jnp.float32)
    h = jnp.asarray(h, dtype=jnp.float32)
    batch, dim = z.shape
    dim_h = dim * (dim - 1) // 2
    assert h.shape == (batch, dim_h)

    logdet = jnp.zeros((1,), dtype=jnp.float32)

    # dim == 1: strictly-lower part is empty, map is identity.
    if dim_h == 0:
        return z, logdet

    vmem_cap = _vmem_cap_bytes()
    dim_p = _round_up(dim, 128)           # lane-dense output width
    dim_h_128 = _round_up(dim_h, 128)     # minimal lane-dense dim_h padding
    batch_aligned = _round_up(batch, 8)

    def _pick_tb(fit):
        tb = max(8, min(max_tb, _round_down(max(fit, 8), 8)))
        tb = min(tb, batch_aligned)
        if batch_aligned >= 16:
            # Ensure >= 2 batch tiles so the "parallel" axis can shard across
            # both TensorCores on v7x (one extra grid step is negligible on
            # single-TC generations).
            tb = min(tb, max(8, _round_up(batch_aligned // 2, 8)))
        return tb

    # ---- resident plan: S^T / R live in VMEM (f32) for the whole call ----
    sel_res_bytes = 2 * 2 * dim_p * dim_h_128 * 4       # 2 mats, dbl-buffered
    row_res_bytes = 16 * dim_p + 8 * dim_h_128          # z + out + h per row (dbl buf)
    tb_res_fit = ((vmem_cap - sel_res_bytes) // row_res_bytes
                  if vmem_cap > sel_res_bytes else 0)
    use_resident = (not force_streamed) and tb_res_fit >= 8

    if use_resident:
        dim_h_p = dim_h_128
        tb = _pick_tb(tb_res_fit)
        batch_p = _round_up(batch, tb)
        s_t, r = _selection_matrices(dim, dim_p, dim_h, dim_h_p, jnp.float32)
        z_p = _maybe_pad(z, batch_p, dim_p)
        h_p = _maybe_pad(h, batch_p, dim_h_p)
        grid = (batch_p // tb,)
        vmem_est = sel_res_bytes + tb * row_res_bytes
        in_specs = [
            pl.BlockSpec((tb, dim_p), lambda b: (b, 0)),        # z
            pl.BlockSpec((tb, dim_h_p), lambda b: (b, 0)),      # h
            pl.BlockSpec((dim_p, dim_h_p), lambda b: (0, 0)),   # S^T (resident)
            pl.BlockSpec((dim_h_p, dim_p), lambda b: (0, 0)),   # R   (resident)
        ]
        out_spec = pl.BlockSpec((tb, dim_p), lambda b: (b, 0))
        kernel = _linear_map_kernel_resident
        dim_sem = ("parallel",)
    else:
        # ---- streamed fallback for large dim ----
        tk = min(max_tk, 512, dim_h_128)
        tk = max(128, _round_down(tk, 128))
        while tk > 128 and ((vmem_cap - 8 * dim_p * tk)
                            // (16 * dim_p + 8 * tk)) < 8:
            tk -= 128
        dim_h_p = _round_up(dim_h, tk)                   # full k blocks, zero-padded
        sel_str_bytes = 8 * dim_p * tk                   # bf16 chunks, dbl-buffered
        row_str_bytes = 16 * dim_p + 8 * tk
        tb_fit = ((vmem_cap - sel_str_bytes) // row_str_bytes
                  if vmem_cap > sel_str_bytes else 8)
        tb = _pick_tb(tb_fit)
        batch_p = _round_up(batch, tb)
        s_t, r = _selection_matrices(dim, dim_p, dim_h, dim_h_p, jnp.bfloat16)
        z_p = _maybe_pad(z, batch_p, dim_p)
        h_p = _maybe_pad(h, batch_p, dim_h_p)
        grid = (batch_p // tb, dim_h_p // tk)
        vmem_est = sel_str_bytes + tb * row_str_bytes
        in_specs = [
            pl.BlockSpec((tb, dim_p), lambda b, k: (b, 0)),     # z (resident over k)
            pl.BlockSpec((tb, tk), lambda b, k: (b, k)),        # h chunk
            pl.BlockSpec((dim_p, tk), lambda b, k: (0, k)),     # S^T chunk
            pl.BlockSpec((tk, dim_p), lambda b, k: (k, 0)),     # R chunk
        ]
        out_spec = pl.BlockSpec((tb, dim_p), lambda b, k: (b, 0))
        kernel = _linear_map_kernel_streamed
        dim_sem = ("parallel", "arbitrary")

    # Estimate already includes double buffers; only modest (x1.3) headroom.
    vmem_limit = int(min(vmem_cap, max(vmem_est * 13 // 10, 16 * 2**20)))

    cost = pl.CostEstimate(
        flops=4 * batch_p * dim_h_p * dim_p,             # two matmuls
        transcendentals=0,
        bytes_accessed=(2 * batch_p * dim_p + batch_p * dim_h_p) * 4
        + 2 * dim_p * dim_h_p * (4 if use_resident else 2),
    )

    f_z_p = pl.pallas_call(
        kernel,
        out_shape=jax.ShapeDtypeStruct((batch_p, dim_p), jnp.float32),
        grid_spec=pltpu.PrefetchScalarGridSpec(
            num_scalar_prefetch=0,
            grid=grid,
            in_specs=in_specs,
            out_specs=out_spec,
        ),
        compiler_params=pltpu.CompilerParams(
            dimension_semantics=dim_sem,
            vmem_limit_bytes=vmem_limit,
            allow_input_fusion=[True, True, True, True],
        ),
        cost_estimate=cost,
    )(z_p, h_p, s_t, r)

    return f_z_p[:batch, :dim], logdet


# ---------------------------------------------------------------------------
# Self-test
# ---------------------------------------------------------------------------

def _reference(z, h):
    """Pure-numpy reference mirroring the PyTorch loop construction."""
    zn = np.asarray(z)
    hn = np.asarray(h)
    batch, dim = zn.shape
    l_mat = np.zeros((batch, dim, dim), dtype=np.float32)
    k = 0
    for i in range(dim):
        for j in range(0, i + 1):
            l_mat[:, i, j] = hn[:, k] if j < i else 1.0
            if i != j:
                k += 1
    return np.squeeze(l_mat @ zn[:, :, None])


if __name__ == "__main__":
    key = jax.random.PRNGKey(0)

    # Test 1: small shapes, resident-selection-matrix path.
    batch, dim = 4, 8
    dim_h = dim * (dim - 1) // 2
    kz, kh = jax.random.split(key)
    z = jax.random.normal(kz, (batch, dim), dtype=jnp.float32)
    h = jax.random.normal(kh, (batch, dim_h), dtype=jnp.float32)

    f_z, logdet = linear_map_forward(z, h)
    jax.block_until_ready(f_z)
    jax.block_until_ready(logdet)

    if not np.allclose(np.asarray(f_z), _reference(z, h), atol=1e-4, rtol=1e-5):
        raise AssertionError("resident-path kernel does not match reference")
    if not np.allclose(np.asarray(logdet), 0.0):
        raise AssertionError("logdet should be zero")

    # Test 2: exercise the streamed (k-chunked) fallback path at small scale.
    batch2, dim2 = 16, 24
    dim_h2 = dim2 * (dim2 - 1) // 2
    kz2, kh2 = jax.random.split(kh)
    z2 = jax.random.normal(kz2, (batch2, dim2), dtype=jnp.float32)
    h2 = jax.random.normal(kh2, (batch2, dim_h2), dtype=jnp.float32)

    f_z2, _ = linear_map_forward(z2, h2, max_tk=128, force_streamed=True)
    jax.block_until_ready(f_z2)

    if not np.allclose(np.asarray(f_z2), _reference(z2, h2), atol=1e-4, rtol=1e-5):
        raise AssertionError("streamed-path kernel does not match reference")

    print("KERNEL_OK")
</pallas_src>

<mosaic_0001>
module attributes {stable_mosaic.version = 11 : i64} {
  func.func @_linear_map_kernel_resident(%arg0: i32, %arg1: memref<8x128xf32, #tpu.memory_space<vmem>>, %arg2: memref<8x128xf32, #tpu.memory_space<vmem>>, %arg3: memref<128x128xf32, #tpu.memory_space<vmem>>, %arg4: memref<128x128xf32, #tpu.memory_space<vmem>>, %arg5: memref<8x128xf32, #tpu.memory_space<vmem>>) attributes {dimension_semantics = [#tpu.dimension_semantics<parallel>], iteration_bounds = array<i64: 1>, scalar_prefetch = 0 : i64, scratch_operands = 0 : i64, tpu.core_type = #tpu.core_type<tc>, window_params = [{transform_indices = @transform_0, window_bounds = array<i64: 8, 128>}, {transform_indices = @transform_1, window_bounds = array<i64: 8, 128>}, {pipeline_mode = #tpu.pipeline_mode<synchronous>, transform_indices = @transform_2, window_bounds = array<i64: 128, 128>}, {pipeline_mode = #tpu.pipeline_mode<synchronous>, transform_indices = @transform_3, window_bounds = array<i64: 128, 128>}, {transform_indices = @transform_4, window_bounds = array<i64: 8, 128>}]} {
    %c0 = arith.constant 0 : index
    %c0_0 = arith.constant 0 : index
    %0 = vector.load %arg1[%c0, %c0_0] : memref<8x128xf32, #tpu.memory_space<vmem>>, vector<8x128xf32>
    %c0_1 = arith.constant 0 : index
    %c0_2 = arith.constant 0 : index
    %1 = vector.load %arg3[%c0_1, %c0_2] : memref<128x128xf32, #tpu.memory_space<vmem>>, vector<128x128xf32>
    %cst = arith.constant dense<0.000000e+00> : vector<8x128xf32>
    %2 = tpu.matmul %0, %1, %cst {dimension_numbers = #tpu.dot_dimension_numbers<[1], [0], [0], [1], [0, 0, 1, 1], [], []>} : vector<8x128xf32>, vector<128x128xf32>, vector<8x128xf32> -> vector<8x128xf32>
    %c0_3 = arith.constant 0 : index
    %c0_4 = arith.constant 0 : index
    %3 = vector.load %arg2[%c0_3, %c0_4] : memref<8x128xf32, #tpu.memory_space<vmem>>, vector<8x128xf32>
    %4 = arith.mulf %3, %2 : vector<8x128xf32>
    %c0_5 = arith.constant 0 : index
    %c0_6 = arith.constant 0 : index
    %5 = vector.load %arg4[%c0_5, %c0_6] : memref<128x128xf32, #tpu.memory_space<vmem>>, vector<128x128xf32>
    %cst_7 = arith.constant dense<0.000000e+00> : vector<8x128xf32>
    %6 = tpu.matmul %4, %5, %cst_7 {dimension_numbers = #tpu.dot_dimension_numbers<[1], [0], [0], [1], [0, 0, 1, 1], [], []>} : vector<8x128xf32>, vector<128x128xf32>, vector<8x128xf32> -> vector<8x128xf32>
    %7 = arith.addf %0, %6 : vector<8x128xf32>
    %c0_8 = arith.constant 0 : index
    %c0_9 = arith.constant 0 : index
    %8 = vector.load %arg5[%c0_8, %c0_9] : memref<8x128xf32, #tpu.memory_space<vmem>>, vector<8x128xf32>
    tpu.vector_store %arg5[%c0_8, %c0_9], %7 {strides = array<i32>} : memref<8x128xf32, #tpu.memory_space<vmem>>, vector<8x128xf32>,
    return
  }
  func.func @transform_0(%arg0: i32) -> (i32, i32) {
    %c0_i32 = arith.constant 0 : i32
    %c0_i32_0 = arith.constant 0 : i32
    return %arg0, %c0_i32 : i32, i32
  }
  func.func @transform_1(%arg0: i32) -> (i32, i32) {
    %c0_i32 = arith.constant 0 : i32
    %c0_i32_0 = arith.constant 0 : i32
    return %arg0, %c0_i32 : i32, i32
  }
  func.func @transform_2(%arg0: i32) -> (i32, i32) {
    %c0_i32 = arith.constant 0 : i32
    %c0_i32_0 = arith.constant 0 : i32
    %c0_i32_1 = arith.constant 0 : i32
    return %c0_i32, %c0_i32_0 : i32, i32
  }
  func.func @transform_3(%arg0: i32) -> (i32, i32) {
    %c0_i32 = arith.constant 0 : i32
    %c0_i32_0 = arith.constant 0 : i32
    %c0_i32_1 = arith.constant 0 : i32
    return %c0_i32, %c0_i32_0 : i32, i32
  }
  func.func @transform_4(%arg0: i32) -> (i32, i32) {
    %c0_i32 = arith.constant 0 : i32
    %c0_i32_0 = arith.constant 0 : i32
    return %arg0, %c0_i32 : i32, i32
  }
}

</mosaic_0001>

<llo_original>
// kernel: tpu_custom_call.1
$region0: #{tpu_custom_call.1}
  #allocation0 [shape = 'u32[]', space=smem, size = 0x4, offset = 0x4, fixed_abs, tag = 'smem constant byte address 0x4 - core index']
  #allocation1 [shape = 'u32[144,128]{1,0:T(1,128)}', space=vmem, size = 0x12000, scoped, tag = 'internal scratch']
  %s0 = inlined_call_operand.hbm [shape: f32[8,128], index: 0, kind: input, shape index: {}]
  %s1 = inlined_call_operand.hbm [shape: f32[8,128], index: 1, kind: input, shape index: {}]
  %s2 = inlined_call_operand.hbm [shape: f32[128,128], index: 2, kind: input, shape index: {}]
  %s3 = inlined_call_operand.hbm [shape: f32[128,128], index: 3, kind: input, shape index: {}]
  %s4 = inlined_call_operand.hbm [shape: f32[8,128], index: 4, kind: output, shape index: {}]
  %s5 = sld [smem:[#allocation0]]
  $region42: #{tpu_custom_call.1} parent=0
    _
  %s7 = ssub.s32 1, %s5
  %s8 = scalar_select 0, %s7, %s5
  $region1: #{tpu_custom_call.1} parent=0
    #allocation2 [shape = 'u8[4096]{0}', space=vmem, size = 0x1000, scoped, tag = 'input window, operand 0, single buffered']
    #allocation3 [shape = 's32[1]{0}', space=sflag, size = 0x4, scoped, tag = 'scoped memory for tpu_custom_call.1']
    #allocation4 [shape = 's32[1]{0}', space=sflag, size = 0x4, scoped, tag = 'scoped memory for tpu_custom_call.1']
    #allocation5 [shape = 'u8[4096]{0}', space=vmem, size = 0x1000, scoped, tag = 'input window, operand 1, single buffered']
    #allocation6 [shape = 's32[1]{0}', space=sflag, size = 0x4, scoped, tag = 'scoped memory for tpu_custom_call.1']
    #allocation7 [shape = 'u8[65536]{0}', space=vmem, size = 0x10000, scoped, tag = 'input window, operand 2, single buffered']
    #allocation8 [shape = 'u8[65536]{0}', space=vmem, size = 0x10000, scoped, tag = 'input window, operand 3, single buffered']
    #allocation9 [shape = 's32[1]{0}', space=sflag, size = 0x4, scoped, tag = 'scoped memory for tpu_custom_call.1']
    #allocation10 [shape = 'u8[4096]{0}', space=vmem, size = 0x1000, scoped, tag = 'output window, operand 0, single buffered']
    %9 = vsyncpa [#allocation3], 0
    %10 = vsyncpa [#allocation6], 0
    %11 = vsyncpa [#allocation9], 0
    %12 = vsyncpa [#allocation4], 0
    // Predicated region
    $region2: #{tpu_custom_call.1} parent=1 // pred_check
      _
    $region3: #{tpu_custom_call.1} parent=1 // pred_check_branch
      %14 = sbr.rel (0) target = $region5
    $region4: #{tpu_custom_call.1} parent=1 // pred_region
      %s16 = ssub.s32 128, 128
      %17 = vsyncadd [#allocation3], %s16
      %s19 = sshll.u32 [#allocation2], 4
      %s20 = int_to_ptr.vmem [resolvable:$true] %s19
      %22 = dma.hbm_to_vmem [thread:$0]  %s0, 128, %s20, [#allocation3]
    $region5: #{tpu_custom_call.1} parent=1 // pred_fallthru
      _
    // Predicated region
    $region6: #{tpu_custom_call.1} parent=1 // pred_check
      _
    $region7: #{tpu_custom_call.1} parent=1 // pred_check_branch
      %24 = sbr.rel (0) target = $region9
    $region8: #{tpu_custom_call.1} parent=1 // pred_region
      %s26 = ssub.s32 128, 128
      %27 = vsyncadd [#allocation6], %s26
      %s29 = sshll.u32 [#allocation5], 4
      %s30 = int_to_ptr.vmem [resolvable:$true] %s29
      %32 = dma.hbm_to_vmem [thread:$0]  %s1, 128, %s30, [#allocation6]
    $region9: #{tpu_custom_call.1} parent=1 // pred_fallthru
      _
    // Predicated region
    $region10: #{tpu_custom_call.1} parent=1 // pred_check
      _
    $region11: #{tpu_custom_call.1} parent=1 // pred_check_branch
      %34 = sbr.rel (0) target = $region13
    $region12: #{tpu_custom_call.1} parent=1 // pred_region
      %s36 = ssub.s32 2048, 2048
      %37 = vsyncadd [#allocation6], %s36
      %s38 = sshll.u32 [#allocation7], 4
      %s39 = int_to_ptr.vmem [resolvable:$true] %s38
      %44 = dma.hbm_to_vmem [thread:$0]  %s2, 2048, %s39, [#allocation6], 128, 128, 8
    $region13: #{tpu_custom_call.1} parent=1 // pred_fallthru
      _
    // Predicated region
    $region14: #{tpu_custom_call.1} parent=1 // pred_check
      _
    $region15: #{tpu_custom_call.1} parent=1 // pred_check_branch
      %46 = sbr.rel (0) target = $region17
    $region16: #{tpu_custom_call.1} parent=1 // pred_region
      %s48 = ssub.s32 2048, 2048
      %49 = vsyncadd [#allocation9], %s48
      %s50 = sshll.u32 [#allocation8], 4
      %s51 = int_to_ptr.vmem [resolvable:$true] %s50
      %56 = dma.hbm_to_vmem [thread:$0]  %s3, 2048, %s51, [#allocation9], 128, 128, 8
    $region17: #{tpu_custom_call.1} parent=1 // pred_fallthru
      _
    // Predicated region
    $region18: #{tpu_custom_call.1} parent=1 // pred_check
      _
    $region19: #{tpu_custom_call.1} parent=1 // pred_check_branch
      %58 = sbr.rel (0) target = $region21
    $region20: #{tpu_custom_call.1} parent=1 // pred_region
      %59 = dma.done [#allocation3], 128
    $region21: #{tpu_custom_call.1} parent=1 // pred_fallthru
      _
    // Predicated region
    $region22: #{tpu_custom_call.1} parent=1 // pred_check
      _
    $region23: #{tpu_custom_call.1} parent=1 // pred_check_branch
      %61 = sbr.rel (0) target = $region25
    $region24: #{tpu_custom_call.1} parent=1 // pred_region
      %62 = dma.done [#allocation6], 128
    $region25: #{tpu_custom_call.1} parent=1 // pred_fallthru
      _
    // Predicated region
    $region26: #{tpu_custom_call.1} parent=1 // pred_check
      _
    $region27: #{tpu_custom_call.1} parent=1 // pred_check_branch
      %64 = sbr.rel (0) target = $region29
    $region28: #{tpu_custom_call.1} parent=1 // pred_region
      %65 = dma.done [#allocation6], 2048
    $region29: #{tpu_custom_call.1} parent=1 // pred_fallthru
      _
    // Predicated region
    $region30: #{tpu_custom_call.1} parent=1 // pred_check
      _
    $region31: #{tpu_custom_call.1} parent=1 // pred_check_branch
      %67 = sbr.rel (0) target = $region33
    $region32: #{tpu_custom_call.1} parent=1 // pred_region
      %68 = dma.done [#allocation9], 2048
    $region33: #{tpu_custom_call.1} parent=1 // pred_fallthru
      _
    %v69 = vld [vmem:[#allocation2] sm:$0xff]
    %v70 = vld [vmem:[#allocation7] sm:$0xff]
    %v71 = vld [vmem:[#allocation7 + $0x8] sm:$0xff]
    %v72 = vld [vmem:[#allocation7 + $0x10] sm:$0xff]
    %v73 = vld [vmem:[#allocation7 + $0x18] sm:$0xff]
    %v74 = vld [vmem:[#allocation7 + $0x20] sm:$0xff]
    %v75 = vld [vmem:[#allocation7 + $0x28] sm:$0xff]
    %v76 = vld [vmem:[#allocation7 + $0x30] sm:$0xff]
    %v77 = vld [vmem:[#allocation7 + $0x38] sm:$0xff]
    %v78 = vld [vmem:[#allocation7 + $0x40] sm:$0xff]
    %v79 = vld [vmem:[#allocation7 + $0x48] sm:$0xff]
    %v80 = vld [vmem:[#allocation7 + $0x50] sm:$0xff]
    %v81 = vld [vmem:[#allocation7 + $0x58] sm:$0xff]
    %v82 = vld [vmem:[#allocation7 + $0x60] sm:$0xff]
    %v83 = vld [vmem:[#allocation7 + $0x68] sm:$0xff]
    %v84 = vld [vmem:[#allocation7 + $0x70] sm:$0xff]
    %v85 = vld [vmem:[#allocation7 + $0x78] sm:$0xff]
    %86 = vmatprep.subr.mxu0 0.0
    %87 = vmatpush1.msra.mxu0 %v85
    %88 = vmatprep.subr.mxu0 0.0
    %89 = vmatpush1.msra.mxu0 %v84
    %90 = vmatprep.subr.mxu0 0.0
    %91 = vmatpush1.msra.mxu0 %v83
    %92 = vmatprep.subr.mxu0 0.0
    %93 = vmatpush1.msra.mxu0 %v82
    %94 = vmatprep.subr.mxu0 0.0
    %95 = vmatpush1.msra.mxu0 %v81
    %96 = vmatprep.subr.mxu0 0.0
    %97 = vmatpush1.msra.mxu0 %v80
    %98 = vmatprep.subr.mxu0 0.0
    %99 = vmatpush1.msra.mxu0 %v79
    %100 = vmatprep.subr.mxu0 0.0
    %101 = vmatpush1.msra.mxu0 %v78
    %102 = vmatprep.subr.mxu0 0.0
    %103 = vmatpush1.msra.mxu0 %v77
    %104 = vmatprep.subr.mxu0 0.0
    %105 = vmatpush1.msra.mxu0 %v76
    %106 = vmatprep.subr.mxu0 0.0
    %107 = vmatpush1.msra.mxu0 %v75
    %108 = vmatprep.subr.mxu0 0.0
    %109 = vmatpush1.msra.mxu0 %v74
    %110 = vmatprep.subr.mxu0 0.0
    %111 = vmatpush1.msra.mxu0 %v73
    %112 = vmatprep.subr.mxu0 0.0
    %113 = vmatpush1.msra.mxu0 %v72
    %114 = vmatprep.subr.mxu0 0.0
    %115 = vmatpush1.msra.mxu0 %v71
    %116 = vmatprep.subr.mxu0 0.0
    %117 = vmatpush1.msra.mxu0 %v70
    %118 = vmatprep.subr.mxu0 0.0
    %119 = vmatpush2.msra.mxu0 0.0
    %120 = vmatprep.subr.mxu0 0.0
    %121 = vmatpush2.msra.mxu0 0.0
    %122 = vmatprep.subr.mxu0 0.0
    %123 = vmatpush2.msra.mxu0 0.0
    %124 = vmatprep.subr.mxu0 0.0
    %125 = vmatpush2.msra.mxu0 0.0
    %126 = vmatprep.subr.mxu0 0.0
    %127 = vmatpush2.msra.mxu0 0.0
    %128 = vmatprep.subr.mxu0 0.0
    %129 = vmatpush2.msra.mxu0 0.0
    %130 = vmatprep.subr.mxu0 0.0
    %131 = vmatpush2.msra.mxu0 0.0
    %132 = vmatprep.subr.mxu0 0.0
    %133 = vmatpush2.msra.mxu0 0.0
    %134 = vmatprep.subr.mxu0 0.0
    %135 = vmatpush2.msra.mxu0 0.0
    %136 = vmatprep.subr.mxu0 0.0
    %137 = vmatpush2.msra.mxu0 0.0
    %138 = vmatprep.subr.mxu0 0.0
    %139 = vmatpush2.msra.mxu0 0.0
    %140 = vmatprep.subr.mxu0 0.0
    %141 = vmatpush2.msra.mxu0 0.0
    %142 = vmatprep.subr.mxu0 0.0
    %143 = vmatpush2.msra.mxu0 0.0
    %144 = vmatprep.subr.mxu0 0.0
    %145 = vmatpush2.msra.mxu0 0.0
    %146 = vmatprep.subr.mxu0 0.0
    %147 = vmatpush2.msra.mxu0 0.0
    %148 = vmatprep.subr.mxu0 0.0
    %149 = vmatpush2.msra.mxu0 0.0
    %150 = vmatprep.mubr.f32.mxu0 0.0
    %151 = vmatmul.mubr.f32.gmra.mxu0 %v69
    %v152 = vpop.f32.mrf.mxu0
    %v153 = vadd.f32 0.0, %v152
    %v154 = vpop.f32.mrf.mxu0
    %155 = vdwg.mxu0
    %v156 = vld [vmem:[#allocation5] sm:$0xff]
    %v157 = vmul.f32 %v156, %v153
    %v158 = vld [vmem:[#allocation8] sm:$0xff]
    %v159 = vld [vmem:[#allocation8 + $0x8] sm:$0xff]
    %v160 = vld [vmem:[#allocation8 + $0x10] sm:$0xff]
    %v161 = vld [vmem:[#allocation8 + $0x18] sm:$0xff]
    %v162 = vld [vmem:[#allocation8 + $0x20] sm:$0xff]
    %v163 = vld [vmem:[#allocation8 + $0x28] sm:$0xff]
    %v164 = vld [vmem:[#allocation8 + $0x30] sm:$0xff]
    %v165 = vld [vmem:[#allocation8 + $0x38] sm:$0xff]
    %v166 = vld [vmem:[#allocation8 + $0x40] sm:$0xff]
    %v167 = vld [vmem:[#allocation8 + $0x48] sm:$0xff]
    %v168 = vld [vmem:[#allocation8 + $0x50] sm:$0xff]
    %v169 = vld [vmem:[#allocation8 + $0x58] sm:$0xff]
    %v170 = vld [vmem:[#allocation8 + $0x60] sm:$0xff]
    %v171 = vld [vmem:[#allocation8 + $0x68] sm:$0xff]
    %v172 = vld [vmem:[#allocation8 + $0x70] sm:$0xff]
    %v173 = vld [vmem:[#allocation8 + $0x78] sm:$0xff]
    %174 = vmatprep.subr.mxu0 0.0
    %175 = vmatpush1.msra.mxu0 %v173
    %176 = vmatprep.subr.mxu0 0.0
    %177 = vmatpush1.msra.mxu0 %v172
    %178 = vmatprep.subr.mxu0 0.0
    %179 = vmatpush1.msra.mxu0 %v171
    %180 = vmatprep.subr.mxu0 0.0
    %181 = vmatpush1.msra.mxu0 %v170
    %182 = vmatprep.subr.mxu0 0.0
    %183 = vmatpush1.msra.mxu0 %v169
    %184 = vmatprep.subr.mxu0 0.0
    %185 = vmatpush1.msra.mxu0 %v168
    %186 = vmatprep.subr.mxu0 0.0
    %187 = vmatpush1.msra.mxu0 %v167
    %188 = vmatprep.subr.mxu0 0.0
    %189 = vmatpush1.msra.mxu0 %v166
    %190 = vmatprep.subr.mxu0 0.0
    %191 = vmatpush1.msra.mxu0 %v165
    %192 = vmatprep.subr.mxu0 0.0
    %193 = vmatpush1.msra.mxu0 %v164
    %194 = vmatprep.subr.mxu0 0.0
    %195 = vmatpush1.msra.mxu0 %v163
    %196 = vmatprep.subr.mxu0 0.0
    %197 = vmatpush1.msra.mxu0 %v162
    %198 = vmatprep.subr.mxu0 0.0
    %199 = vmatpush1.msra.mxu0 %v161
    %200 = vmatprep.subr.mxu0 0.0
    %201 = vmatpush1.msra.mxu0 %v160
    %202 = vmatprep.subr.mxu0 0.0
    %203 = vmatpush1.msra.mxu0 %v159
    %204 = vmatprep.subr.mxu0 0.0
    %205 = vmatpush1.msra.mxu0 %v158
    %206 = vmatprep.subr.mxu0 0.0
    %207 = vmatpush2.msra.mxu0 0.0
    %208 = vmatprep.subr.mxu0 0.0
    %209 = vmatpush2.msra.mxu0 0.0
    %210 = vmatprep.subr.mxu0 0.0
    %211 = vmatpush2.msra.mxu0 0.0
    %212 = vmatprep.subr.mxu0 0.0
    %213 = vmatpush2.msra.mxu0 0.0
    %214 = vmatprep.subr.mxu0 0.0
    %215 = vmatpush2.msra.mxu0 0.0
    %216 = vmatprep.subr.mxu0 0.0
    %217 = vmatpush2.msra.mxu0 0.0
    %218 = vmatprep.subr.mxu0 0.0
    %219 = vmatpush2.msra.mxu0 0.0
    %220 = vmatprep.subr.mxu0 0.0
    %221 = vmatpush2.msra.mxu0 0.0
    %222 = vmatprep.subr.mxu0 0.0
    %223 = vmatpush2.msra.mxu0 0.0
    %224 = vmatprep.subr.mxu0 0.0
    %225 = vmatpush2.msra.mxu0 0.0
    %226 = vmatprep.subr.mxu0 0.0
    %227 = vmatpush2.msra.mxu0 0.0
    %228 = vmatprep.subr.mxu0 0.0
    %229 = vmatpush2.msra.mxu0 0.0
    %230 = vmatprep.subr.mxu0 0.0
    %231 = vmatpush2.msra.mxu0 0.0
    %232 = vmatprep.subr.mxu0 0.0
    %233 = vmatpush2.msra.mxu0 0.0
    %234 = vmatprep.subr.mxu0 0.0
    %235 = vmatpush2.msra.mxu0 0.0
    %236 = vmatprep.subr.mxu0 0.0
    %237 = vmatpush2.msra.mxu0 0.0
    %238 = vmatprep.mubr.f32.mxu0 0.0
    %239 = vmatmul.mubr.f32.gmra.mxu0 %v157
    %v240 = vpop.f32.mrf.mxu0
    %v241 = vadd.f32 0.0, %v240
    %v242 = vpop.f32.mrf.mxu0
    %243 = vdwg.mxu0
    %v244 = vadd.f32 %v69, %v241
    %245 = vst [vmem:[#allocation10] sm:$0xff] %v244
    // Predicated region
    $region34: #{tpu_custom_call.1} parent=1 // pred_check
      _
    $region35: #{tpu_custom_call.1} parent=1 // pred_check_branch
      %247 = sbr.rel (0) target = $region37
    $region36: #{tpu_custom_call.1} parent=1 // pred_region
      %s249 = ssub.s32 128, 128
      %250 = vsyncadd [#allocation4], %s249
      %s252 = sshll.u32 [#allocation10], 4
      %s253 = int_to_ptr.vmem [resolvable:$true] %s252
      %255 = dma.vmem_to_hbm [thread:$0]  %s253, 128, %s4, [#allocation4]
    $region37: #{tpu_custom_call.1} parent=1 // pred_fallthru
      _
    // Predicated region
    $region38: #{tpu_custom_call.1} parent=1 // pred_check
      _
    $region39: #{tpu_custom_call.1} parent=1 // pred_check_branch
      %257 = sbr.rel (0) target = $region41
    $region40: #{tpu_custom_call.1} parent=1 // pred_region
      %258 = dma.done [#allocation4], 128
    $region41: #{tpu_custom_call.1} parent=1 // pred_fallthru
      _
    %259 = vsyncpa [#allocation3], 1
    %260 = vsyncpa [#allocation6], 1
    %261 = vsyncpa [#allocation9], 1
    %262 = vsyncpa [#allocation4], 1

</llo_original>
